<compile_context>
chip_gen: v5e
topology: v5e:2x2
jax: 0.10.0
libtpu: 0.0.40
codegen_flags: <defaults>
</compile_context>

<pallas_src>
import functools

import jax
import jax.numpy as jnp
from jax.experimental import pallas as pl
from jax.experimental.pallas import tpu as pltpu


def _round_up(x, m):
    return (x + m - 1) // m * m


def _joint_loss_kernel(x_ref, t_ref, m_ref, o_ref, acc_ref, *, total_n, tm):
    i = pl.program_id(0)

    @pl.when(i == 0)
    def _init():
        acc_ref[...] = jnp.zeros_like(acc_ref)

    x = x_ref[...].astype(jnp.float32)     # [TM, C]
    t = t_ref[...]                         # [TM, 1] int32
    m = m_ref[...]                         # [C, C] bf16 (resident, single-buffered)

    # Row softmax pieces in log-difference form (no divide, no materialized p).
    x_max = jnp.max(x, axis=1, keepdims=True)            # [TM, 1]
    e = jnp.exp(x - x_max)                                # [TM, C]  (EUP)
    sum_e = jnp.sum(e, axis=1, keepdims=True)             # [TM, 1]  (XLU)

    # In-kernel gather of mask rows: one_hot(targets) @ mask rides the MXU.
    # bf16 operands, f32 accumulation -> bit-exact for 0/1 and 0/alpha entries.
    lane = jax.lax.broadcasted_iota(jnp.int32, x.shape, 1)
    onehot = (lane == t).astype(jnp.bfloat16)             # [TM, C]
    tmask = jnp.dot(onehot, m, preferred_element_type=jnp.float32)  # [TM, C] f32
    sum_me = jnp.sum(tmask * e, axis=1, keepdims=True)    # [TM, 1]

    # log(sum(mask * softmax(x))) = log(sum_me) - log(sum_e); x_max cancels.
    # (If every target-equivalent class underflows this gives -inf, matching torch.)
    per_row = jnp.log(sum_me) - jnp.log(sum_e)            # [TM, 1]

    # Drop ragged-tile garbage rows with a select so no NaN/-inf can leak.
    rows = jax.lax.broadcasted_iota(jnp.int32, per_row.shape, 0) + i * tm
    contrib = jnp.where(rows < total_n, per_row, jnp.zeros_like(per_row))
    acc_ref[...] += jnp.sum(contrib, axis=(0, 1), keepdims=True)

    @pl.when(i == pl.num_programs(0) - 1)
    def _finalize():
        # Lane-dense, unmasked full-block store; the epilogue only reads [0, 0].
        o_ref[...] = jnp.broadcast_to(acc_ref[...], o_ref.shape)


def _pick_tile_rows(c, in_dtype):
    """Generation-aware row-tile size + VMEM limit from a complete VMEM budget."""
    try:
        vmem_cap = int(pltpu.get_tpu_info().vmem_capacity_bytes)
    except Exception:
        vmem_cap = 64 * 1024 * 1024          # conservative fallback (v7x per-TC)
    budget = int(vmem_cap * 0.55)

    c_lanes = _round_up(c, 128)
    in_bytes = jnp.dtype(in_dtype).itemsize
    fixed = _round_up(c, 8) * c_lanes * 2    # bf16 mask, single-buffered
    fixed += 2 * 8 * 128 * 4                 # output block
    per_row = 2 * c_lanes * in_bytes         # double-buffered logits tile
    per_row += 2 * 128 * 4                   # (TM,1) int32 targets tile, lane-padded, x2 buffers
    per_row += 6 * c_lanes * 4               # live f32 [TM,C] temporaries (x, e, tmask, products, ...)

    tm = (budget - fixed) // max(per_row, 1)
    tm = max(8, min(1024, (tm // 8) * 8))

    vmem_limit = min(int(vmem_cap * 0.70), vmem_cap - 8 * 1024 * 1024)
    vmem_limit = max(vmem_limit, 16 * 1024 * 1024)
    return tm, vmem_limit


@functools.partial(jax.jit, static_argnames=("tile_rows",))
def joint_loss(inputs, mask, targets, tile_rows=None):
    """inputs: [N, C] float, mask: [C, C] float, targets: [N] int -> scalar loss."""
    n, c = inputs.shape
    assert mask.shape == (c, c)

    tm, vmem_limit = _pick_tile_rows(c, inputs.dtype)
    if tile_rows is not None:
        tm = tile_rows
    tm = max(8, min(tm, _round_up(n, 8)))
    tiles = pl.cdiv(n, tm)

    # Only these tiny per-call casts/reshapes touch HBM outside the kernel; the
    # [N, C] logits are streamed by the kernel directly (no padding copy).
    # NOTE: bf16 mask is exact as long as alpha is exactly representable in
    # bfloat16 (true for the module default alpha=1 and small integers).
    m_bf = mask.astype(jnp.bfloat16)
    t2 = targets.astype(jnp.int32).reshape(n, 1)

    kernel = functools.partial(_joint_loss_kernel, total_n=n, tm=tm)

    cost = pl.CostEstimate(
        flops=2 * n * c * c + 6 * n * c,
        transcendentals=n * c + 2 * n,
        bytes_accessed=(inputs.size * inputs.dtype.itemsize
                        + n * 4 + c * c * 2 + 8 * 128 * 4),
    )

    partial_sum = pl.pallas_call(
        kernel,
        out_shape=jax.ShapeDtypeStruct((8, 128), jnp.float32),
        grid=(tiles,),
        in_specs=[
            pl.BlockSpec((tm, c), lambda i: (i, 0)),              # streamed logits tile
            pl.BlockSpec((tm, 1), lambda i: (i, 0)),              # streamed targets tile
            pl.BlockSpec((c, c), lambda i: (0, 0),
                         pipeline_mode=pl.Buffered(1)),            # resident bf16 mask
        ],
        out_specs=pl.BlockSpec((8, 128), lambda i: (0, 0)),
        scratch_shapes=[pltpu.VMEM((1, 1), jnp.float32)],
        compiler_params=pltpu.CompilerParams(
            dimension_semantics=("arbitrary",),
            vmem_limit_bytes=vmem_limit,
        ),
        cost_estimate=cost,
    )(inputs, t2, m_bf)

    # Tiny epilogue: negate and divide by the TRUE batch size.
    return -(partial_sum[0, 0] / jnp.float32(n))


def build_mask(num_class, same_id_list, alpha=1.0):
    """Deterministic re-implementation of JointLoss.set_mask (identity*alpha + same-id links)."""
    mask = jnp.zeros((num_class, num_class), dtype=jnp.float32)
    mask = mask.at[jnp.arange(num_class), jnp.arange(num_class)].set(alpha)
    for id_list in same_id_list:
        if len(id_list) == 2:
            a, b = id_list
            mask = mask.at[a, b].set(alpha)
            mask = mask.at[b, a].set(alpha)
        if len(id_list) == 3:
            a, b, c = id_list
            for i, j in [(a, b), (a, c), (b, a), (b, c), (c, a), (c, b)]:
                mask = mask.at[i, j].set(alpha)
    return mask


if __name__ == "__main__":
    N, C = 8, 16  # batch=8 samples, num_class=16

    key = jax.random.PRNGKey(0)
    k_in, k_tgt = jax.random.split(key)
    inputs = jax.random.normal(k_in, (N, C), dtype=jnp.float32)
    targets = jax.random.randint(k_tgt, (N,), 0, C, dtype=jnp.int32)

    # Deterministic "same identity" groups, alpha=1 (module default).
    mask = build_mask(C, same_id_list=[[1, 2], [3, 4, 5]], alpha=1.0)

    loss = joint_loss(inputs, mask, targets)
    jax.block_until_ready(loss)

    # Sanity check against a pure-JAX transcription of the torch forward.
    p_ref = jax.nn.softmax(inputs, axis=1)
    ref = -jnp.mean(jnp.log(jnp.sum(mask[targets] * p_ref, axis=1)))
    assert jnp.allclose(loss, ref, rtol=1e-5, atol=1e-5), (loss, ref)

    # Edge case: every target-equivalent class underflows -> loss = +inf,
    # matching f32 torch behaviour (the softmax probability underflows to 0).
    inputs_uf = inputs.at[:, 0].set(-1e4)
    targets_uf = jnp.zeros((N,), dtype=jnp.int32)
    loss_uf = joint_loss(inputs_uf, mask, targets_uf)
    jax.block_until_ready(loss_uf)
    assert bool(jnp.isinf(loss_uf)) and float(loss_uf) > 0, loss_uf

    print("KERNEL_OK")
</pallas_src>

<mosaic_0001>
module attributes {stable_mosaic.version = 11 : i64} {
  func.func @_joint_loss_kernel(%arg0: i32, %arg1: memref<8x16xf32, #tpu.memory_space<vmem>>, %arg2: memref<8x1xi32, #tpu.memory_space<vmem>>, %arg3: memref<16x16xbf16, #tpu.memory_space<vmem>>, %arg4: memref<8x128xf32, #tpu.memory_space<vmem>>, %arg5: memref<1x1xf32, #tpu.memory_space<vmem>>) attributes {dimension_semantics = [#tpu.dimension_semantics<arbitrary>], iteration_bounds = array<i64: 1>, scalar_prefetch = 0 : i64, scratch_operands = 1 : i64, tpu.core_type = #tpu.core_type<tc>, window_params = [{transform_indices = @transform_0, window_bounds = array<i64: 8, 16>}, {transform_indices = @transform_1, window_bounds = array<i64: 8, 1>}, {pipeline_mode = #tpu.pipeline_mode<synchronous>, transform_indices = @transform_2, window_bounds = array<i64: 16, 16>}, {pipeline_mode = #tpu.pipeline_mode<synchronous>, transform_indices = @transform_3, window_bounds = array<i64: 8, 128>}]} {
    %c0_i32 = arith.constant 0 : i32
    %0 = arith.cmpi eq, %arg0, %c0_i32 : i32
    %1 = arith.extui %0 : i1 to i32
    %c0_i32_0 = arith.constant 0 : i32
    %2 = arith.cmpi ne, %1, %c0_i32_0 : i32
    scf.if %2 {
      %cst_18 = arith.constant 0.000000e+00 : f32
      %45 = vector.broadcast %cst_18 : f32 to vector<1x1xf32>
      %c0_19 = arith.constant 0 : index
      %c0_20 = arith.constant 0 : index
      %46 = vector.load %arg5[%c0_19, %c0_20] : memref<1x1xf32, #tpu.memory_space<vmem>>, vector<1x1xf32>
      tpu.vector_store %arg5[%c0_19, %c0_20], %45 {strides = array<i32>} : memref<1x1xf32, #tpu.memory_space<vmem>>, vector<1x1xf32>,
    } else {
    }
    %c0 = arith.constant 0 : index
    %c0_1 = arith.constant 0 : index
    %3 = vector.load %arg1[%c0, %c0_1] : memref<8x16xf32, #tpu.memory_space<vmem>>, vector<8x16xf32>
    %c0_2 = arith.constant 0 : index
    %c0_3 = arith.constant 0 : index
    %4 = vector.load %arg2[%c0_2, %c0_3] : memref<8x1xi32, #tpu.memory_space<vmem>>, vector<8x1xi32>
    %c0_4 = arith.constant 0 : index
    %c0_5 = arith.constant 0 : index
    %5 = vector.load %arg3[%c0_4, %c0_5] : memref<16x16xbf16, #tpu.memory_space<vmem>>, vector<16x16xbf16>
    %cst = arith.constant dense<0xFF800000> : vector<8xf32>
    %6 = vector.multi_reduction <maximumf>, %3, %cst [1] : vector<8x16xf32> to vector<8xf32>
    %7 = vector.shape_cast %6 : vector<8xf32> to vector<8x1xf32>
    %8 = vector.broadcast %7 : vector<8x1xf32> to vector<8x16xf32>
    %9 = arith.subf %3, %8 : vector<8x16xf32>
    %10 = math.exp %9 : vector<8x16xf32>
    %cst_6 = arith.constant dense<0.000000e+00> : vector<8xf32>
    %11 = vector.multi_reduction <add>, %10, %cst_6 [1] : vector<8x16xf32> to vector<8xf32>
    %12 = vector.shape_cast %11 : vector<8xf32> to vector<8x1xf32>
    %13 = tpu.iota {dimensions = array<i32: 1>} : vector<8x16xi32>
    %14 = vector.broadcast %4 : vector<8x1xi32> to vector<8x16xi32>
    %15 = arith.cmpi eq, %13, %14 : vector<8x16xi32>
    %16 = arith.extui %15 : vector<8x16xi1> to vector<8x16xi32>
    %17 = arith.sitofp %16 : vector<8x16xi32> to vector<8x16xf32>
    %18 = arith.truncf %17 : vector<8x16xf32> to vector<8x16xbf16>
    %cst_7 = arith.constant dense<0.000000e+00> : vector<8x16xf32>
    %19 = tpu.matmul %18, %5, %cst_7 {dimension_numbers = #tpu.dot_dimension_numbers<[1], [0], [0], [1], [0, 0, 1, 1], [], []>} : vector<8x16xbf16>, vector<16x16xbf16>, vector<8x16xf32> -> vector<8x16xf32>
    %20 = arith.mulf %19, %10 : vector<8x16xf32>
    %cst_8 = arith.constant dense<0.000000e+00> : vector<8xf32>
    %21 = vector.multi_reduction <add>, %20, %cst_8 [1] : vector<8x16xf32> to vector<8xf32>
    %22 = vector.shape_cast %21 : vector<8xf32> to vector<8x1xf32>
    %23 = math.log %22 : vector<8x1xf32>
    %24 = math.log %12 : vector<8x1xf32>
    %25 = arith.subf %23, %24 : vector<8x1xf32>
    %26 = tpu.iota {dimensions = array<i32: 0>} : vector<8x1xi32>
    %c8_i32 = arith.constant 8 : i32
    %27 = arith.muli %arg0, %c8_i32 : i32
    %28 = vector.broadcast %27 : i32 to vector<8x1xi32>
    %29 = arith.addi %26, %28 : vector<8x1xi32>
    %c8_i32_9 = arith.constant 8 : i32
    %30 = vector.broadcast %c8_i32_9 : i32 to vector<8x1xi32>
    %31 = arith.cmpi slt, %29, %30 : vector<8x1xi32>
    %cst_10 = arith.constant 0.000000e+00 : f32
    %32 = vector.broadcast %cst_10 : f32 to vector<8x1xf32>
    %33 = arith.select %31, %25, %32 : vector<8x1xi1>, vector<8x1xf32>
    %c0_11 = arith.constant 0 : index
    %c0_12 = arith.constant 0 : index
    %34 = vector.load %arg5[%c0_11, %c0_12] : memref<1x1xf32, #tpu.memory_space<vmem>>, vector<1x1xf32>
    %35 = vector.shape_cast %33 : vector<8x1xf32> to vector<1x8x1xf32>
    %cst_13 = arith.constant dense<0.000000e+00> : vector<1xf32>
    %36 = vector.multi_reduction <add>, %35, %cst_13 [1, 2] : vector<1x8x1xf32> to vector<1xf32>
    %37 = vector.shape_cast %36 : vector<1xf32> to vector<1x1x1xf32>
    %38 = vector.extract %37[0, 0, 0] : f32 from vector<1x1x1xf32>
    %39 = vector.broadcast %38 : f32 to vector<1x1xf32>
    %40 = arith.addf %34, %39 : vector<1x1xf32>
    %c0_14 = arith.constant 0 : index
    %c0_15 = arith.constant 0 : index
    %41 = vector.load %arg5[%c0_14, %c0_15] : memref<1x1xf32, #tpu.memory_space<vmem>>, vector<1x1xf32>
    tpu.vector_store %arg5[%c0_14, %c0_15], %40 {strides = array<i32>} : memref<1x1xf32, #tpu.memory_space<vmem>>, vector<1x1xf32>,
    %c0_i32_16 = arith.constant 0 : i32
    %42 = arith.cmpi eq, %arg0, %c0_i32_16 : i32
    %43 = arith.extui %42 : i1 to i32
    %c0_i32_17 = arith.constant 0 : i32
    %44 = arith.cmpi ne, %43, %c0_i32_17 : i32
    scf.if %44 {
      %c0_18 = arith.constant 0 : index
      %c0_19 = arith.constant 0 : index
      %45 = vector.load %arg5[%c0_18, %c0_19] : memref<1x1xf32, #tpu.memory_space<vmem>>, vector<1x1xf32>
      %46 = vector.shape_cast %45 : vector<1x1xf32> to vector<1x1xf32>
      %47 = vector.broadcast %46 : vector<1x1xf32> to vector<8x128xf32>
      %c0_20 = arith.constant 0 : index
      %c0_21 = arith.constant 0 : index
      %48 = vector.load %arg4[%c0_20, %c0_21] : memref<8x128xf32, #tpu.memory_space<vmem>>, vector<8x128xf32>
      tpu.vector_store %arg4[%c0_20, %c0_21], %47 {strides = array<i32>} : memref<8x128xf32, #tpu.memory_space<vmem>>, vector<8x128xf32>,
    } else {
    }
    return
  }
  func.func @transform_0(%arg0: i32) -> (i32, i32) {
    %c0_i32 = arith.constant 0 : i32
    %c0_i32_0 = arith.constant 0 : i32
    return %arg0, %c0_i32 : i32, i32
  }
  func.func @transform_1(%arg0: i32) -> (i32, i32) {
    %c0_i32 = arith.constant 0 : i32
    %c0_i32_0 = arith.constant 0 : i32
    return %arg0, %c0_i32 : i32, i32
  }
  func.func @transform_2(%arg0: i32) -> (i32, i32) {
    %c0_i32 = arith.constant 0 : i32
    %c0_i32_0 = arith.constant 0 : i32
    %c0_i32_1 = arith.constant 0 : i32
    return %c0_i32, %c0_i32_0 : i32, i32
  }
  func.func @transform_3(%arg0: i32) -> (i32, i32) {
    %c0_i32 = arith.constant 0 : i32
    %c0_i32_0 = arith.constant 0 : i32
    %c0_i32_1 = arith.constant 0 : i32
    return %c0_i32, %c0_i32_0 : i32, i32
  }
}

</mosaic_0001>

<llo_original>
// kernel: joint_loss.1
$region0: #{joint_loss.1}
  #allocation0 [shape = 'u32[]', space=smem, size = 0x4, offset = 0x4, fixed_abs, tag = 'smem constant byte address 0x4 - core index']
  #allocation1 [shape = 'u32[72,128]{1,0:T(1,128)}', space=vmem, size = 0x9000, scoped, tag = 'internal scratch']
  #allocation2 [shape = 'f32[1,1]{1,0:T(1,128)}', space=vmem, size = 0x200, scoped, tag = 'scratch operand']
  %s0 = inlined_call_operand.vmem [shape: f32[8,16], index: 0, kind: input, shape index: {}]
  %s1 = inlined_call_operand.vmem [shape: s32[8,1], index: 1, kind: input, shape index: {}]
  %s2 = inlined_call_operand.vmem [shape: bf16[16,16], index: 2, kind: input, shape index: {}]
  %s3 = inlined_call_operand.vmem [shape: f32[8,128], index: 3, kind: output, shape index: {}]
  %s4 = sld [smem:[#allocation0]]
  $region30: #{joint_loss.1} parent=0
    _
  %s6 = ssub.s32 1, %s4
  %s7 = scalar_select 0, %s6, %s4
  // Predicated region
  $region2: #{joint_loss.1} parent=0 // pred_check
    _
  $region3: #{joint_loss.1} parent=0 // pred_check_branch
    %9 = sbr.rel (0) target = $region5
  $region4: #{joint_loss.1} parent=0 // pred_region
    _
  $region5: #{joint_loss.1} parent=0 // pred_fallthru
    _
  // Predicated region
  $region6: #{joint_loss.1} parent=0 // pred_check
    _
  $region7: #{joint_loss.1} parent=0 // pred_check_branch
    %11 = sbr.rel (0) target = $region9
  $region8: #{joint_loss.1} parent=0 // pred_region
    _
  $region9: #{joint_loss.1} parent=0 // pred_fallthru
    _
  // Predicated region
  $region10: #{joint_loss.1} parent=0 // pred_check
    _
  $region11: #{joint_loss.1} parent=0 // pred_check_branch
    %13 = sbr.rel (0) target = $region13
  $region12: #{joint_loss.1} parent=0 // pred_region
    _
  $region13: #{joint_loss.1} parent=0 // pred_fallthru
    _
  %p15 = scmp.eq.s32.totalorder 0, 0
  // Predicated region
  $region14: #{joint_loss.1} parent=0 // pred_check
    %p16 = pneg %p15
  $region15: #{joint_loss.1} parent=0 // pred_check_branch
    %18 = sbr.rel (%p16) target = $region17
  $region16: #{joint_loss.1} parent=0 // pred_region
    %vm19 = vcmask 0
    %20 = vst.msk [vmem:[#allocation2] sm:$0x1] %vm19, 0.0
  $region17: #{joint_loss.1} parent=0 // pred_fallthru
    _
  %v21 = vld [vmem:[%s0] sm:$0xff]
  %v22 = vld [vmem:[%s1] sm:$0xff]
  %v23 = vld [vmem:[%s2] sm:$0xf]
  %v24 = vld [vmem:[%s2 + $0x4] sm:$0xf]
  %vm25 = vcmask 130048
  %v26 = vsel %vm25, %v21, -inf
  %27 = vmax.xlane.f32.xlu0 %v26
  %v28 = vpop.xlane.xlu0 %27
  %v29 = vsub.f32 %v21, %v28
  %v30 = vmul.f32 %v29, 1.442695
  %v31 = vpow.pop %v30
  %v32 = vsel %vm25, %v31, 0.0
  %33 = vadd.xlane.f32.xlu0 %v32
  %v34 = vpop.xlane.xlu0 %33
  %v35 = vlaneseq
  %v36 = vand.u32 %v35, 127
  %37 = vset.pattern.permute.xlu0 0
  %38 = vperm.xlu0 %37, %v22
  %v39 = vpop.permute.xlu0 %38
  %vm40 = vcmp.eq.s32.totalorder %v36, %v39
  %v41 = vsel %vm40, 1, 0
  %v42 = vcvt.s32.f32 %v41
  %v43 = vpack.c.bf16 %v42, %v42
  %v46 = vunpack.c.l.b16 %v23
  %v47 = vunpack.c.l.b16 %v24
  %v48 = vpack.c.b16 %v47, %v46
  %v51 = vsel %vm25, %v43, 0
  %53 = vmatpush.bf16.msra.mxu0 0
  %54 = vmatpush.bf16.msra.mxu0 0
  %55 = vmatpush.bf16.msra.mxu0 0
  %56 = vmatpush.bf16.msra.mxu0 0
  %57 = vmatpush.bf16.msra.mxu0 0
  %58 = vmatpush.bf16.msra.mxu0 0
  %59 = vmatpush.bf16.msra.mxu0 0
  %60 = vmatpush.bf16.msra.mxu0 %v48
  %61 = vmatmul.bf16.gmra.mxu0 %v51
  %v62 = vpop.f32.mrf.mxu0
  %v63 = vadd.f32 0.0, %v62
  %v64 = vpop.f32.mrf.mxu0
  %65 = vdwg.mxu0
  %v66 = vmul.f32 %v63, %v31
  %v67 = vsel %vm25, %v66, 0.0
  %68 = vadd.xlane.f32.xlu0 %v67
  %v69 = vpop.xlane.xlu0 %68
  %v70 = vlog2.pop %v69
  %v71 = vmul.f32 %v70, 0.6931472
  %v72 = vlog2.pop %v34
  %v73 = vmul.f32 %v72, 0.6931472
  %v74 = vsub.f32 %v71, %v73
  %v75 = vlaneseq
  %v76 = vshrl.u32 %v75, 7
  %s77 = smul.u32 0, 8
  %v78 = vstv %s77
  %v79 = vadd.s32 %v76, %v78
  %vm80 = vcmp.lt.s32.totalorder %v79, 8
  %v81 = vsel %vm80, %v74, 0.0
  %v82 = vld [vmem:[#allocation2] sm:$0x1]
  %vm83 = vcmask 7168
  %v84 = vsel %vm83, %v81, 0.0
  %85 = vadd.xlane.f32.xlu0 %v84
  %v86 = vpop.xlane.xlu0 %85
  %v87 = vrot.slane %v86, 4
  %v88 = vadd.f32 %v86, %v87
  %v89 = vrot.slane %v88, 2
  %v90 = vadd.f32 %v88, %v89
  %v91 = vrot.slane %v90, 1
  %v92 = vadd.f32 %v90, %v91
  %s93 = vtos %v92
  %v94 = vstv %s93
  %v95 = vadd.f32 %v82, %v94
  %vm96 = vcmask 0
  %97 = vst.msk [vmem:[#allocation2] sm:$0x1] %vm96, %v95
  // Predicated region
  $region18: #{joint_loss.1} parent=0 // pred_check
    %p98 = pneg %p15
  $region19: #{joint_loss.1} parent=0 // pred_check_branch
    %100 = sbr.rel (%p98) target = $region21
  $region20: #{joint_loss.1} parent=0 // pred_region
    %v101 = vld [vmem:[#allocation2] sm:$0x1]
    %v103 = vperm.slane %v101, 0
    %104 = vset.pattern.permute.xlu0 0
    %105 = vperm.xlu0 %104, %v103
    %v106 = vpop.permute.xlu0 %105
    %108 = vst [vmem:[%s3] sm:$0xff] %v106
  $region21: #{joint_loss.1} parent=0 // pred_fallthru
    _
  // Predicated region
  $region22: #{joint_loss.1} parent=0 // pred_check
    _
  $region23: #{joint_loss.1} parent=0 // pred_check_branch
    %110 = sbr.rel (0) target = $region25
  $region24: #{joint_loss.1} parent=0 // pred_region
    _
  $region25: #{joint_loss.1} parent=0 // pred_fallthru
    _
  // Predicated region
  $region26: #{joint_loss.1} parent=0 // pred_check
    _
  $region27: #{joint_loss.1} parent=0 // pred_check_branch
    %112 = sbr.rel (0) target = $region29
  $region28: #{joint_loss.1} parent=0 // pred_region
    _
  $region29: #{joint_loss.1} parent=0 // pred_fallthru
    _

</llo_original>
